<compile_context>
chip_gen: v5e
topology: v5e:2x2
jax: 0.10.0
libtpu: 0.0.40
codegen_flags: <defaults>
</compile_context>

<pallas_src>
import jax
import jax.numpy as jnp
from jax.experimental import pallas as pl
from jax.experimental.pallas import tpu as pltpu

_HIDDEN = 128
_LANE = 128
_SUBLANE = 8


def _round_up(x, m):
    return ((x + m - 1) // m) * m


def _pos_classifier_kernel(x1_ref, x2_ref,
                           w1_ref, b1_ref,
                           w2_ref, b2_ref,
                           w3_ref, b3_ref,
                           o_ref):
    # x = x1 - x2  (elementwise, VPU, f32)
    x = (x1_ref[...] - x2_ref[...]).astype(jnp.float32)

    mm_dtype = w1_ref.dtype  # weights were pre-cast once in the wrapper

    # Linear(D, 128) + LeakyReLU(0.1); MXU operands in mm_dtype, f32 accumulate.
    h = jnp.dot(x.astype(mm_dtype), w1_ref[...],
                preferred_element_type=jnp.float32) + b1_ref[...]
    h = jnp.maximum(h, 0.1 * h)

    # Linear(128, 128) + LeakyReLU(0.1)
    h = jnp.dot(h.astype(mm_dtype), w2_ref[...],
                preferred_element_type=jnp.float32) + b2_ref[...]
    h = jnp.maximum(h, 0.1 * h)

    # Linear(128, Cp) -- Cp is lane-padded to 128 so the store is lane-dense.
    o = jnp.dot(h.astype(mm_dtype), w3_ref[...],
                preferred_element_type=jnp.float32) + b3_ref[...]
    o_ref[...] = o.astype(o_ref.dtype)


def position_classifier_forward(x1, x2, params, *, block_b=512,
                                matmul_dtype=jnp.bfloat16):
    """Fused (x1 - x2) -> Linear(D,128) -> LeakyReLU(0.1) -> Linear(128,128)
    -> LeakyReLU(0.1) -> Linear(128,C).

    params: w1(D,128), b1(1,128), w2(128,128), b2(1,128), w3(128,C), b3(1,C)
    -- weights stored transposed (in, out).

    matmul_dtype controls the MXU operand dtype (bf16 = fast path on v6e/v7x;
    use jnp.float32 / None for bit-exact f32).  Accumulation, biases and all
    elementwise ops are f32 regardless.
    """
    B, D = x1.shape
    C = params["w3"].shape[1]
    out_dtype = x1.dtype

    # Weights: cast once here (never per grid step inside the kernel).
    w1, w2, w3 = params["w1"], params["w2"], params["w3"]
    b1, b2, b3 = params["b1"], params["b2"], params["b3"]
    if matmul_dtype is not None and w1.dtype != matmul_dtype:
        w1 = w1.astype(matmul_dtype)
        w2 = w2.astype(matmul_dtype)
        w3 = w3.astype(matmul_dtype)

    # Lane-pad only the tiny last-layer weight/bias so output stores are
    # unmasked full-lane stores.  Skipped entirely when C is already aligned.
    Cp = _round_up(C, _LANE)
    if Cp != C:
        w3 = jnp.zeros((_HIDDEN, Cp), w3.dtype).at[:, :C].set(w3)
        b3 = jnp.zeros((1, Cp), b3.dtype).at[:, :C].set(b3)

    in_isz = jnp.dtype(x1.dtype).itemsize
    w_isz = jnp.dtype(w1.dtype).itemsize
    out_isz = jnp.dtype(out_dtype).itemsize

    # Batch tile: large for roofline, multiple of 8 sublanes, no input padding.
    blk = _round_up(min(block_b, _round_up(B, _SUBLANE)), _SUBLANE)

    def _vmem_bytes(b):
        return (2 * 2 * b * D * in_isz                        # x1/x2, dbl-buffered
                + 2 * b * Cp * out_isz                        # out, dbl-buffered
                + 2 * (D + _HIDDEN + Cp) * _HIDDEN * w_isz    # weights
                + 2 * (2 * _HIDDEN + Cp) * 4)                 # biases (f32)

    _VMEM_BUDGET = 40 << 20   # conservative vs. v7x's 64 MiB physical VMEM
    while blk > _SUBLANE and _vmem_bytes(blk) > _VMEM_BUDGET:
        blk = _round_up(blk // 2, _SUBLANE)

    # Guarantee >= 2 grid steps for moderate batches so the "parallel" batch
    # axis can actually shard across both v7x TensorCores.
    if B >= 2 * _SUBLANE and pl.cdiv(B, blk) == 1:
        blk = _round_up(pl.cdiv(B, 2), _SUBLANE)

    grid = (pl.cdiv(B, blk),)

    vmem_limit = int(min(max(2 * _vmem_bytes(blk) + (2 << 20), 16 << 20),
                         48 << 20))

    cost = pl.CostEstimate(
        flops=2 * B * (D * _HIDDEN + _HIDDEN * _HIDDEN + _HIDDEN * Cp),
        transcendentals=0,
        bytes_accessed=(2 * B * D * in_isz + B * Cp * out_isz
                        + (D + _HIDDEN + Cp) * _HIDDEN * w_isz
                        + (2 * _HIDDEN + Cp) * 4),
    )

    out = pl.pallas_call(
        _pos_classifier_kernel,
        out_shape=jax.ShapeDtypeStruct((B, Cp), out_dtype),
        grid_spec=pl.GridSpec(
            grid=grid,
            in_specs=[
                pl.BlockSpec((blk, D), lambda i: (i, 0)),            # x1 tile
                pl.BlockSpec((blk, D), lambda i: (i, 0)),            # x2 tile
                pl.BlockSpec((D, _HIDDEN), lambda i: (0, 0)),        # w1 (resident)
                pl.BlockSpec((1, _HIDDEN), lambda i: (0, 0)),        # b1
                pl.BlockSpec((_HIDDEN, _HIDDEN), lambda i: (0, 0)),  # w2
                pl.BlockSpec((1, _HIDDEN), lambda i: (0, 0)),        # b2
                pl.BlockSpec((_HIDDEN, Cp), lambda i: (0, 0)),       # w3 (padded)
                pl.BlockSpec((1, Cp), lambda i: (0, 0)),             # b3 (padded)
            ],
            out_specs=pl.BlockSpec((blk, Cp), lambda i: (i, 0)),     # lane-dense
        ),
        compiler_params=pltpu.CompilerParams(
            dimension_semantics=("parallel",),
            vmem_limit_bytes=vmem_limit),
        cost_estimate=cost,
    )(x1, x2, w1, b1, w2, b2, w3, b3)

    # Drop class padding (batch is never padded).
    return out[:, :C] if Cp != C else out


def init_params(key, classifier_d, class_num=8, dtype=jnp.float32):
    """PyTorch nn.Linear default init (U(-1/sqrt(in), 1/sqrt(in))).
    Weights stored transposed: (in, out)."""
    def linear(key, fan_in, fan_out):
        kw, kb = jax.random.split(key)
        bound = 1.0 / jnp.sqrt(fan_in)
        w = jax.random.uniform(kw, (fan_in, fan_out), dtype, -bound, bound)
        b = jax.random.uniform(kb, (1, fan_out), dtype, -bound, bound)
        return w, b

    k1, k2, k3 = jax.random.split(key, 3)
    w1, b1 = linear(k1, classifier_d, 128)
    w2, b2 = linear(k2, 128, 128)
    w3, b3 = linear(k3, 128, class_num)
    return dict(w1=w1, b1=b1, w2=w2, b2=b2, w3=w3, b3=b3)


def reference_forward(x1, x2, params):
    """Pure-JAX reference for correctness check."""
    x = x1 - x2
    h = x @ params["w1"] + params["b1"]
    h = jnp.where(h > 0, h, 0.1 * h)
    h = h @ params["w2"] + params["b2"]
    h = jnp.where(h > 0, h, 0.1 * h)
    return h @ params["w3"] + params["b3"]


if __name__ == "__main__":
    # Small, deterministic shapes consistent with the module:
    # batch=8, classifier_d=64, class_num=8.
    B, D, C = 8, 64, 8

    key = jax.random.PRNGKey(0)
    kx1, kx2, kp = jax.random.split(key, 3)
    x1 = jax.random.normal(kx1, (B, D), jnp.float32)
    x2 = jax.random.normal(kx2, (B, D), jnp.float32)
    params = init_params(kp, D, C)

    ref = reference_forward(x1, x2, params)

    # Bit-exact f32 path (strict tolerance).
    out_f32 = jax.block_until_ready(
        position_classifier_forward(x1, x2, params, matmul_dtype=jnp.float32))
    assert out_f32.shape == (B, C)
    assert jnp.allclose(out_f32, ref, atol=1e-5, rtol=1e-5)

    # Default fast path: bf16 MXU operands, f32 accumulation (loose tolerance).
    out_bf16 = jax.block_until_ready(
        position_classifier_forward(x1, x2, params))
    assert out_bf16.shape == (B, C)
    assert jnp.allclose(out_bf16, ref, atol=1e-1, rtol=1e-1)

    print("KERNEL_OK")
</pallas_src>

<mosaic_0001>
module attributes {stable_mosaic.version = 11 : i64} {
  func.func @_pos_classifier_kernel(%arg0: i32, %arg1: memref<8x64xf32, #tpu.memory_space<vmem>>, %arg2: memref<8x64xf32, #tpu.memory_space<vmem>>, %arg3: memref<64x128xf32, #tpu.memory_space<vmem>>, %arg4: memref<1x128xf32, #tpu.memory_space<vmem>>, %arg5: memref<128x128xf32, #tpu.memory_space<vmem>>, %arg6: memref<1x128xf32, #tpu.memory_space<vmem>>, %arg7: memref<128x128xf32, #tpu.memory_space<vmem>>, %arg8: memref<1x128xf32, #tpu.memory_space<vmem>>, %arg9: memref<8x128xf32, #tpu.memory_space<vmem>>) attributes {dimension_semantics = [#tpu.dimension_semantics<parallel>], iteration_bounds = array<i64: 1>, scalar_prefetch = 0 : i64, scratch_operands = 0 : i64, tpu.core_type = #tpu.core_type<tc>, window_params = [{transform_indices = @transform_0, window_bounds = array<i64: 8, 64>}, {transform_indices = @transform_1, window_bounds = array<i64: 8, 64>}, {pipeline_mode = #tpu.pipeline_mode<synchronous>, transform_indices = @transform_2, window_bounds = array<i64: 64, 128>}, {pipeline_mode = #tpu.pipeline_mode<synchronous>, transform_indices = @transform_3, window_bounds = array<i64: 1, 128>}, {pipeline_mode = #tpu.pipeline_mode<synchronous>, transform_indices = @transform_4, window_bounds = array<i64: 128, 128>}, {pipeline_mode = #tpu.pipeline_mode<synchronous>, transform_indices = @transform_5, window_bounds = array<i64: 1, 128>}, {pipeline_mode = #tpu.pipeline_mode<synchronous>, transform_indices = @transform_6, window_bounds = array<i64: 128, 128>}, {pipeline_mode = #tpu.pipeline_mode<synchronous>, transform_indices = @transform_7, window_bounds = array<i64: 1, 128>}, {transform_indices = @transform_8, window_bounds = array<i64: 8, 128>}]} {
    %c0 = arith.constant 0 : index
    %c0_0 = arith.constant 0 : index
    %0 = vector.load %arg1[%c0, %c0_0] : memref<8x64xf32, #tpu.memory_space<vmem>>, vector<8x64xf32>
    %c0_1 = arith.constant 0 : index
    %c0_2 = arith.constant 0 : index
    %1 = vector.load %arg2[%c0_1, %c0_2] : memref<8x64xf32, #tpu.memory_space<vmem>>, vector<8x64xf32>
    %2 = arith.subf %0, %1 : vector<8x64xf32>
    %c0_3 = arith.constant 0 : index
    %c0_4 = arith.constant 0 : index
    %3 = vector.load %arg3[%c0_3, %c0_4] : memref<64x128xf32, #tpu.memory_space<vmem>>, vector<64x128xf32>
    %cst = arith.constant dense<0.000000e+00> : vector<8x128xf32>
    %4 = tpu.matmul %2, %3, %cst {dimension_numbers = #tpu.dot_dimension_numbers<[1], [0], [0], [1], [0, 0, 1, 1], [], []>} : vector<8x64xf32>, vector<64x128xf32>, vector<8x128xf32> -> vector<8x128xf32>
    %c0_5 = arith.constant 0 : index
    %c0_6 = arith.constant 0 : index
    %5 = vector.load %arg4[%c0_5, %c0_6] : memref<1x128xf32, #tpu.memory_space<vmem>>, vector<1x128xf32>
    %6 = vector.broadcast %5 : vector<1x128xf32> to vector<8x128xf32>
    %7 = arith.addf %4, %6 : vector<8x128xf32>
    %cst_7 = arith.constant 1.000000e-01 : f32
    %8 = vector.broadcast %cst_7 : f32 to vector<8x128xf32>
    %9 = arith.mulf %8, %7 : vector<8x128xf32>
    %10 = arith.maximumf %7, %9 : vector<8x128xf32>
    %c0_8 = arith.constant 0 : index
    %c0_9 = arith.constant 0 : index
    %11 = vector.load %arg5[%c0_8, %c0_9] : memref<128x128xf32, #tpu.memory_space<vmem>>, vector<128x128xf32>
    %cst_10 = arith.constant dense<0.000000e+00> : vector<8x128xf32>
    %12 = tpu.matmul %10, %11, %cst_10 {dimension_numbers = #tpu.dot_dimension_numbers<[1], [0], [0], [1], [0, 0, 1, 1], [], []>} : vector<8x128xf32>, vector<128x128xf32>, vector<8x128xf32> -> vector<8x128xf32>
    %c0_11 = arith.constant 0 : index
    %c0_12 = arith.constant 0 : index
    %13 = vector.load %arg6[%c0_11, %c0_12] : memref<1x128xf32, #tpu.memory_space<vmem>>, vector<1x128xf32>
    %14 = vector.broadcast %13 : vector<1x128xf32> to vector<8x128xf32>
    %15 = arith.addf %12, %14 : vector<8x128xf32>
    %cst_13 = arith.constant 1.000000e-01 : f32
    %16 = vector.broadcast %cst_13 : f32 to vector<8x128xf32>
    %17 = arith.mulf %16, %15 : vector<8x128xf32>
    %18 = arith.maximumf %15, %17 : vector<8x128xf32>
    %c0_14 = arith.constant 0 : index
    %c0_15 = arith.constant 0 : index
    %19 = vector.load %arg7[%c0_14, %c0_15] : memref<128x128xf32, #tpu.memory_space<vmem>>, vector<128x128xf32>
    %cst_16 = arith.constant dense<0.000000e+00> : vector<8x128xf32>
    %20 = tpu.matmul %18, %19, %cst_16 {dimension_numbers = #tpu.dot_dimension_numbers<[1], [0], [0], [1], [0, 0, 1, 1], [], []>} : vector<8x128xf32>, vector<128x128xf32>, vector<8x128xf32> -> vector<8x128xf32>
    %c0_17 = arith.constant 0 : index
    %c0_18 = arith.constant 0 : index
    %21 = vector.load %arg8[%c0_17, %c0_18] : memref<1x128xf32, #tpu.memory_space<vmem>>, vector<1x128xf32>
    %22 = vector.broadcast %21 : vector<1x128xf32> to vector<8x128xf32>
    %23 = arith.addf %20, %22 : vector<8x128xf32>
    %c0_19 = arith.constant 0 : index
    %c0_20 = arith.constant 0 : index
    %24 = vector.load %arg9[%c0_19, %c0_20] : memref<8x128xf32, #tpu.memory_space<vmem>>, vector<8x128xf32>
    tpu.vector_store %arg9[%c0_19, %c0_20], %23 {strides = array<i32>} : memref<8x128xf32, #tpu.memory_space<vmem>>, vector<8x128xf32>,
    return
  }
  func.func @transform_0(%arg0: i32) -> (i32, i32) {
    %c0_i32 = arith.constant 0 : i32
    %c0_i32_0 = arith.constant 0 : i32
    return %arg0, %c0_i32 : i32, i32
  }
  func.func @transform_1(%arg0: i32) -> (i32, i32) {
    %c0_i32 = arith.constant 0 : i32
    %c0_i32_0 = arith.constant 0 : i32
    return %arg0, %c0_i32 : i32, i32
  }
  func.func @transform_2(%arg0: i32) -> (i32, i32) {
    %c0_i32 = arith.constant 0 : i32
    %c0_i32_0 = arith.constant 0 : i32
    %c0_i32_1 = arith.constant 0 : i32
    return %c0_i32, %c0_i32_0 : i32, i32
  }
  func.func @transform_3(%arg0: i32) -> (i32, i32) {
    %c0_i32 = arith.constant 0 : i32
    %c0_i32_0 = arith.constant 0 : i32
    %c0_i32_1 = arith.constant 0 : i32
    return %c0_i32, %c0_i32_0 : i32, i32
  }
  func.func @transform_4(%arg0: i32) -> (i32, i32) {
    %c0_i32 = arith.constant 0 : i32
    %c0_i32_0 = arith.constant 0 : i32
    %c0_i32_1 = arith.constant 0 : i32
    return %c0_i32, %c0_i32_0 : i32, i32
  }
  func.func @transform_5(%arg0: i32) -> (i32, i32) {
    %c0_i32 = arith.constant 0 : i32
    %c0_i32_0 = arith.constant 0 : i32
    %c0_i32_1 = arith.constant 0 : i32
    return %c0_i32, %c0_i32_0 : i32, i32
  }
  func.func @transform_6(%arg0: i32) -> (i32, i32) {
    %c0_i32 = arith.constant 0 : i32
    %c0_i32_0 = arith.constant 0 : i32
    %c0_i32_1 = arith.constant 0 : i32
    return %c0_i32, %c0_i32_0 : i32, i32
  }
  func.func @transform_7(%arg0: i32) -> (i32, i32) {
    %c0_i32 = arith.constant 0 : i32
    %c0_i32_0 = arith.constant 0 : i32
    %c0_i32_1 = arith.constant 0 : i32
    return %c0_i32, %c0_i32_0 : i32, i32
  }
  func.func @transform_8(%arg0: i32) -> (i32, i32) {
    %c0_i32 = arith.constant 0 : i32
    %c0_i32_0 = arith.constant 0 : i32
    return %arg0, %c0_i32 : i32, i32
  }
}

</mosaic_0001>

<llo_original>
// kernel: tpu_custom_call.1
$region0: #{tpu_custom_call.1}
  #allocation0 [shape = 'u32[]', space=smem, size = 0x4, offset = 0x4, fixed_abs, tag = 'smem constant byte address 0x4 - core index']
  #allocation1 [shape = 'u32[72,128]{1,0:T(1,128)}', space=vmem, size = 0x9000, scoped, tag = 'internal scratch']
  %s0 = inlined_call_operand.hbm [shape: f32[8,64], index: 0, kind: input, shape index: {}]
  %s1 = inlined_call_operand.hbm [shape: f32[8,64], index: 1, kind: input, shape index: {}]
  %s2 = inlined_call_operand.hbm [shape: f32[64,128], index: 2, kind: input, shape index: {}]
  %s3 = inlined_call_operand.vmem [shape: f32[1,128], index: 3, kind: input, shape index: {}]
  %s4 = inlined_call_operand.hbm [shape: f32[128,128], index: 4, kind: input, shape index: {}]
  %s5 = inlined_call_operand.vmem [shape: f32[1,128], index: 5, kind: input, shape index: {}]
  %s6 = inlined_call_operand.hbm [shape: f32[128,128], index: 6, kind: input, shape index: {}]
  %s7 = inlined_call_operand.vmem [shape: f32[1,128], index: 7, kind: input, shape index: {}]
  %s8 = inlined_call_operand.hbm [shape: f32[8,128], index: 8, kind: output, shape index: {}]
  %s9 = sld [smem:[#allocation0]]
  $region62: #{tpu_custom_call.1} parent=0
    _
  %s11 = ssub.s32 1, %s9
  %s12 = scalar_select 0, %s11, %s9
  $region1: #{tpu_custom_call.1} parent=0
    #allocation2 [shape = 'u8[4096]{0}', space=vmem, size = 0x1000, scoped, tag = 'input window, operand 0, single buffered']
    #allocation3 [shape = 's32[1]{0}', space=sflag, size = 0x4, scoped, tag = 'scoped memory for tpu_custom_call.1']
    #allocation4 [shape = 's32[1]{0}', space=sflag, size = 0x4, scoped, tag = 'scoped memory for tpu_custom_call.1']
    #allocation5 [shape = 'u8[4096]{0}', space=vmem, size = 0x1000, scoped, tag = 'input window, operand 1, single buffered']
    #allocation6 [shape = 's32[1]{0}', space=sflag, size = 0x4, scoped, tag = 'scoped memory for tpu_custom_call.1']
    #allocation7 [shape = 'u8[32768]{0}', space=vmem, size = 0x8000, scoped, tag = 'input window, operand 2, single buffered']
    #allocation8 [shape = 'u8[65536]{0}', space=vmem, size = 0x10000, scoped, tag = 'input window, operand 4, single buffered']
    #allocation9 [shape = 's32[1]{0}', space=sflag, size = 0x4, scoped, tag = 'scoped memory for tpu_custom_call.1']
    #allocation10 [shape = 'u8[65536]{0}', space=vmem, size = 0x10000, scoped, tag = 'input window, operand 6, single buffered']
    #allocation11 [shape = 'u8[4096]{0}', space=vmem, size = 0x1000, scoped, tag = 'output window, operand 0, single buffered']
    %13 = vsyncpa [#allocation3], 0
    %14 = vsyncpa [#allocation6], 0
    %15 = vsyncpa [#allocation9], 0
    %16 = vsyncpa [#allocation4], 0
    // Predicated region
    $region2: #{tpu_custom_call.1} parent=1 // pred_check
      _
    $region3: #{tpu_custom_call.1} parent=1 // pred_check_branch
      %18 = sbr.rel (0) target = $region5
    $region4: #{tpu_custom_call.1} parent=1 // pred_region
      %20 = vsyncadd [#allocation3], 0
      %s22 = sshll.u32 %s0, 4
      %s23 = int_to_ptr.hbm [resolvable:$true] %s22
      %s24 = sshll.u32 [#allocation2], 4
      %s25 = int_to_ptr.vmem [resolvable:$true] %s24
      %27 = dma.hbm_to_vmem [thread:$0]  %s23, 128, %s25, [#allocation3]
    $region5: #{tpu_custom_call.1} parent=1 // pred_fallthru
      _
    // Predicated region
    $region6: #{tpu_custom_call.1} parent=1 // pred_check
      _
    $region7: #{tpu_custom_call.1} parent=1 // pred_check_branch
      %29 = sbr.rel (0) target = $region9
    $region8: #{tpu_custom_call.1} parent=1 // pred_region
      %31 = vsyncadd [#allocation6], 0
      %s33 = sshll.u32 %s1, 4
      %s34 = int_to_ptr.hbm [resolvable:$true] %s33
      %s35 = sshll.u32 [#allocation5], 4
      %s36 = int_to_ptr.vmem [resolvable:$true] %s35
      %38 = dma.hbm_to_vmem [thread:$0]  %s34, 128, %s36, [#allocation6]
    $region9: #{tpu_custom_call.1} parent=1 // pred_fallthru
      _
    // Predicated region
    $region10: #{tpu_custom_call.1} parent=1 // pred_check
      _
    $region11: #{tpu_custom_call.1} parent=1 // pred_check_branch
      %40 = sbr.rel (0) target = $region13
    $region12: #{tpu_custom_call.1} parent=1 // pred_region
      %42 = vsyncadd [#allocation6], 0
      %s43 = sshll.u32 %s2, 4
      %s44 = int_to_ptr.hbm [resolvable:$true] %s43
      %s45 = sshll.u32 [#allocation7], 4
      %s46 = int_to_ptr.vmem [resolvable:$true] %s45
      %51 = dma.hbm_to_vmem [thread:$0]  %s44, 1024, %s46, [#allocation6], 128, 128, 8
    $region13: #{tpu_custom_call.1} parent=1 // pred_fallthru
      _
    // Predicated region
    $region14: #{tpu_custom_call.1} parent=1 // pred_check
      _
    $region15: #{tpu_custom_call.1} parent=1 // pred_check_branch
      %53 = sbr.rel (0) target = $region17
    $region16: #{tpu_custom_call.1} parent=1 // pred_region
      _
    $region17: #{tpu_custom_call.1} parent=1 // pred_fallthru
      _
    // Predicated region
    $region18: #{tpu_custom_call.1} parent=1 // pred_check
      _
    $region19: #{tpu_custom_call.1} parent=1 // pred_check_branch
      %55 = sbr.rel (0) target = $region21
    $region20: #{tpu_custom_call.1} parent=1 // pred_region
      %57 = vsyncadd [#allocation9], 0
      %s58 = sshll.u32 %s4, 4
      %s59 = int_to_ptr.hbm [resolvable:$true] %s58
      %s60 = sshll.u32 [#allocation8], 4
      %s61 = int_to_ptr.vmem [resolvable:$true] %s60
      %66 = dma.hbm_to_vmem [thread:$0]  %s59, 2048, %s61, [#allocation9], 128, 128, 8
    $region21: #{tpu_custom_call.1} parent=1 // pred_fallthru
      _
    // Predicated region
    $region22: #{tpu_custom_call.1} parent=1 // pred_check
      _
    $region23: #{tpu_custom_call.1} parent=1 // pred_check_branch
      %68 = sbr.rel (0) target = $region25
    $region24: #{tpu_custom_call.1} parent=1 // pred_region
      _
    $region25: #{tpu_custom_call.1} parent=1 // pred_fallthru
      _
    // Predicated region
    $region26: #{tpu_custom_call.1} parent=1 // pred_check
      _
    $region27: #{tpu_custom_call.1} parent=1 // pred_check_branch
      %70 = sbr.rel (0) target = $region29
    $region28: #{tpu_custom_call.1} parent=1 // pred_region
      %72 = vsyncadd [#allocation9], 0
      %s73 = sshll.u32 %s6, 4
      %s74 = int_to_ptr.hbm [resolvable:$true] %s73
      %s75 = sshll.u32 [#allocation10], 4
      %s76 = int_to_ptr.vmem [resolvable:$true] %s75
      %81 = dma.hbm_to_vmem [thread:$0]  %s74, 2048, %s76, [#allocation9], 128, 128, 8
    $region29: #{tpu_custom_call.1} parent=1 // pred_fallthru
      _
    // Predicated region
    $region30: #{tpu_custom_call.1} parent=1 // pred_check
      _
    $region31: #{tpu_custom_call.1} parent=1 // pred_check_branch
      %83 = sbr.rel (0) target = $region33
    $region32: #{tpu_custom_call.1} parent=1 // pred_region
      _
    $region33: #{tpu_custom_call.1} parent=1 // pred_fallthru
      _
    // Predicated region
    $region34: #{tpu_custom_call.1} parent=1 // pred_check
      _
    $region35: #{tpu_custom_call.1} parent=1 // pred_check_branch
      %85 = sbr.rel (0) target = $region37
    $region36: #{tpu_custom_call.1} parent=1 // pred_region
      %87 = dma.done [#allocation3], 128
    $region37: #{tpu_custom_call.1} parent=1 // pred_fallthru
      _
    // Predicated region
    $region38: #{tpu_custom_call.1} parent=1 // pred_check
      _
    $region39: #{tpu_custom_call.1} parent=1 // pred_check_branch
      %89 = sbr.rel (0) target = $region41
    $region40: #{tpu_custom_call.1} parent=1 // pred_region
      %91 = dma.done [#allocation6], 128
    $region41: #{tpu_custom_call.1} parent=1 // pred_fallthru
      _
    // Predicated region
    $region42: #{tpu_custom_call.1} parent=1 // pred_check
      _
    $region43: #{tpu_custom_call.1} parent=1 // pred_check_branch
      %93 = sbr.rel (0) target = $region45
    $region44: #{tpu_custom_call.1} parent=1 // pred_region
      %95 = dma.done [#allocation6], 1024
    $region45: #{tpu_custom_call.1} parent=1 // pred_fallthru
      _
    // Predicated region
    $region46: #{tpu_custom_call.1} parent=1 // pred_check
      _
    $region47: #{tpu_custom_call.1} parent=1 // pred_check_branch
      %97 = sbr.rel (0) target = $region49
    $region48: #{tpu_custom_call.1} parent=1 // pred_region
      %99 = dma.done [#allocation9], 2048
    $region49: #{tpu_custom_call.1} parent=1 // pred_fallthru
      _
    // Predicated region
    $region50: #{tpu_custom_call.1} parent=1 // pred_check
      _
    $region51: #{tpu_custom_call.1} parent=1 // pred_check_branch
      %101 = sbr.rel (0) target = $region53
    $region52: #{tpu_custom_call.1} parent=1 // pred_region
      %103 = dma.done [#allocation9], 2048
    $region53: #{tpu_custom_call.1} parent=1 // pred_fallthru
      _
    %v104 = vld [vmem:[#allocation2] sm:$0xff]
    %v105 = vld [vmem:[#allocation5] sm:$0xff]
    %v106 = vsub.f32 %v104, %v105
    %v107 = vld [vmem:[#allocation7] sm:$0xff]
    %v108 = vld [vmem:[#allocation7 + $0x8] sm:$0xff]
    %v109 = vld [vmem:[#allocation7 + $0x10] sm:$0xff]
    %v110 = vld [vmem:[#allocation7 + $0x18] sm:$0xff]
    %v111 = vld [vmem:[#allocation7 + $0x20] sm:$0xff]
    %v112 = vld [vmem:[#allocation7 + $0x28] sm:$0xff]
    %v113 = vld [vmem:[#allocation7 + $0x30] sm:$0xff]
    %v114 = vld [vmem:[#allocation7 + $0x38] sm:$0xff]
    %v115 = vld [vmem:[%s3] sm:$0x1]
    %v117 = vperm.slane %v115, 0
    %vm119 = vcmask 523264
    %v121 = vsel %vm119, %v106, 0
    %123 = vmatpush.msra.mxu0 0.0
    %124 = vmatpush.msra.mxu0 0.0
    %125 = vmatpush.msra.mxu0 0.0
    %126 = vmatpush.msra.mxu0 0.0
    %127 = vmatpush.msra.mxu0 0.0
    %128 = vmatpush.msra.mxu0 0.0
    %129 = vmatpush.msra.mxu0 0.0
    %130 = vmatpush.msra.mxu0 0.0
    %131 = vmatpush.msra.mxu0 %v114
    %132 = vmatpush.msra.mxu0 %v113
    %133 = vmatpush.msra.mxu0 %v112
    %134 = vmatpush.msra.mxu0 %v111
    %135 = vmatpush.msra.mxu0 %v110
    %136 = vmatpush.msra.mxu0 %v109
    %137 = vmatpush.msra.mxu0 %v108
    %138 = vmatpush.msra.mxu0 %v107
    %139 = vmatmul.f32.gmra.mxu0 %v121
    %v140 = vpop.f32.mrf.mxu0
    %v141 = vadd.f32 %v117, %v140
    %142 = vdwg.mxu0
    %v143 = vmul.f32 %v141, 0.1
    %v144 = vmax.f32 %v141, %v143
    %v145 = vld [vmem:[#allocation8] sm:$0xff]
    %v146 = vld [vmem:[#allocation8 + $0x8] sm:$0xff]
    %v147 = vld [vmem:[#allocation8 + $0x10] sm:$0xff]
    %v148 = vld [vmem:[#allocation8 + $0x18] sm:$0xff]
    %v149 = vld [vmem:[#allocation8 + $0x20] sm:$0xff]
    %v150 = vld [vmem:[#allocation8 + $0x28] sm:$0xff]
    %v151 = vld [vmem:[#allocation8 + $0x30] sm:$0xff]
    %v152 = vld [vmem:[#allocation8 + $0x38] sm:$0xff]
    %v153 = vld [vmem:[#allocation8 + $0x40] sm:$0xff]
    %v154 = vld [vmem:[#allocation8 + $0x48] sm:$0xff]
    %v155 = vld [vmem:[#allocation8 + $0x50] sm:$0xff]
    %v156 = vld [vmem:[#allocation8 + $0x58] sm:$0xff]
    %v157 = vld [vmem:[#allocation8 + $0x60] sm:$0xff]
    %v158 = vld [vmem:[#allocation8 + $0x68] sm:$0xff]
    %v159 = vld [vmem:[#allocation8 + $0x70] sm:$0xff]
    %v160 = vld [vmem:[#allocation8 + $0x78] sm:$0xff]
    %v161 = vld [vmem:[%s5] sm:$0x1]
    %v163 = vperm.slane %v161, 0
    %165 = vmatpush.msra.mxu0 %v160
    %166 = vmatpush.msra.mxu0 %v159
    %167 = vmatpush.msra.mxu0 %v158
    %168 = vmatpush.msra.mxu0 %v157
    %169 = vmatpush.msra.mxu0 %v156
    %170 = vmatpush.msra.mxu0 %v155
    %171 = vmatpush.msra.mxu0 %v154
    %172 = vmatpush.msra.mxu0 %v153
    %173 = vmatpush.msra.mxu0 %v152
    %174 = vmatpush.msra.mxu0 %v151
    %175 = vmatpush.msra.mxu0 %v150
    %176 = vmatpush.msra.mxu0 %v149
    %177 = vmatpush.msra.mxu0 %v148
    %178 = vmatpush.msra.mxu0 %v147
    %179 = vmatpush.msra.mxu0 %v146
    %180 = vmatpush.msra.mxu0 %v145
    %181 = vmatmul.f32.gmra.mxu0 %v144
    %v182 = vpop.f32.mrf.mxu0
    %v183 = vadd.f32 %v163, %v182
    %184 = vdwg.mxu0
    %v185 = vmul.f32 %v183, 0.1
    %v186 = vmax.f32 %v183, %v185
    %v187 = vld [vmem:[#allocation10] sm:$0xff]
    %v188 = vld [vmem:[#allocation10 + $0x8] sm:$0xff]
    %v189 = vld [vmem:[#allocation10 + $0x10] sm:$0xff]
    %v190 = vld [vmem:[#allocation10 + $0x18] sm:$0xff]
    %v191 = vld [vmem:[#allocation10 + $0x20] sm:$0xff]
    %v192 = vld [vmem:[#allocation10 + $0x28] sm:$0xff]
    %v193 = vld [vmem:[#allocation10 + $0x30] sm:$0xff]
    %v194 = vld [vmem:[#allocation10 + $0x38] sm:$0xff]
    %v195 = vld [vmem:[#allocation10 + $0x40] sm:$0xff]
    %v196 = vld [vmem:[#allocation10 + $0x48] sm:$0xff]
    %v197 = vld [vmem:[#allocation10 + $0x50] sm:$0xff]
    %v198 = vld [vmem:[#allocation10 + $0x58] sm:$0xff]
    %v199 = vld [vmem:[#allocation10 + $0x60] sm:$0xff]
    %v200 = vld [vmem:[#allocation10 + $0x68] sm:$0xff]
    %v201 = vld [vmem:[#allocation10 + $0x70] sm:$0xff]
    %v202 = vld [vmem:[#allocation10 + $0x78] sm:$0xff]
    %v203 = vld [vmem:[%s7] sm:$0x1]
    %v205 = vperm.slane %v203, 0
    %207 = vmatpush.msra.mxu0 %v202
    %208 = vmatpush.msra.mxu0 %v201
    %209 = vmatpush.msra.mxu0 %v200
    %210 = vmatpush.msra.mxu0 %v199
    %211 = vmatpush.msra.mxu0 %v198
    %212 = vmatpush.msra.mxu0 %v197
    %213 = vmatpush.msra.mxu0 %v196
    %214 = vmatpush.msra.mxu0 %v195
    %215 = vmatpush.msra.mxu0 %v194
    %216 = vmatpush.msra.mxu0 %v193
    %217 = vmatpush.msra.mxu0 %v192
    %218 = vmatpush.msra.mxu0 %v191
    %219 = vmatpush.msra.mxu0 %v190
    %220 = vmatpush.msra.mxu0 %v189
    %221 = vmatpush.msra.mxu0 %v188
    %222 = vmatpush.msra.mxu0 %v187
    %223 = vmatmul.f32.gmra.mxu0 %v186
    %v224 = vpop.f32.mrf.mxu0
    %v225 = vadd.f32 %v205, %v224
    %226 = vdwg.mxu0
    %227 = vst [vmem:[#allocation11] sm:$0xff] %v225
    // Predicated region
    $region54: #{tpu_custom_call.1} parent=1 // pred_check
      _
    $region55: #{tpu_custom_call.1} parent=1 // pred_check_branch
      %229 = sbr.rel (0) target = $region57
    $region56: #{tpu_custom_call.1} parent=1 // pred_region
      %231 = vsyncadd [#allocation4], 0
      %s233 = sshll.u32 [#allocation11], 4
      %s234 = int_to_ptr.vmem [resolvable:$true] %s233
      %s235 = sshll.u32 %s8, 4
      %s236 = int_to_ptr.hbm [resolvable:$true] %s235
      %238 = dma.vmem_to_hbm [thread:$0]  %s234, 128, %s236, [#allocation4]
    $region57: #{tpu_custom_call.1} parent=1 // pred_fallthru
      _
    // Predicated region
    $region58: #{tpu_custom_call.1} parent=1 // pred_check
      _
    $region59: #{tpu_custom_call.1} parent=1 // pred_check_branch
      %240 = sbr.rel (0) target = $region61
    $region60: #{tpu_custom_call.1} parent=1 // pred_region
      %242 = dma.done [#allocation4], 128
    $region61: #{tpu_custom_call.1} parent=1 // pred_fallthru
      _
    %243 = vsyncpa [#allocation3], 1
    %244 = vsyncpa [#allocation6], 1
    %245 = vsyncpa [#allocation9], 1
    %246 = vsyncpa [#allocation4], 1

</llo_original>
